<compile_context>
chip_gen: v5e
topology: v5e:2x2
jax: 0.10.0
libtpu: 0.0.40
codegen_flags: <defaults>
</compile_context>

<pallas_src>
import jax
import jax.numpy as jnp
from jax.experimental import pallas as pl
from jax.experimental.pallas import tpu as pltpu

HIDDEN = 32      # stand-in for bert-base hidden_size=768 (small test shape)
VOCAB = 64
N_TYPES = 2
MAX_POS = 64
OUT_DIM = 4      # regression output width
OUT_PAD = 128    # lane-dense padded output width


# ----------------------------------------------------------------------------
# Pallas kernel: ResponseAttention + ResponsePromptAttention + regression head
# ----------------------------------------------------------------------------
def _softmax_last(s):
    m = jnp.max(s, axis=-1, keepdims=True)
    e = jnp.exp(s - m)
    # approx reciprocal runs on the EUP slot (essentially free vs. a VALU div)
    return e * pl.reciprocal(jnp.sum(e, axis=-1, keepdims=True), approx=True)


def _dual_attention_kernel(
    essay_ref, prompt_ref,
    wq1_ref, bq1_ref, wkv1_ref, bkv1_ref,
    wq2_ref, bq2_ref, wkv2_ref, bkv2_ref,
    wreg_ref, breg_ref,
    score_ref,
):
    Bt, Se, H = essay_ref.shape
    Sp = prompt_ref.shape[1]

    x = essay_ref[...]          # (Bt, Se, H) essay embeddings for this block
    p = prompt_ref[...]         # (Bt, Sp, H) prompt embeddings for this block

    # ---- ResponseAttention (row-0 query only) ------------------------------
    # Only row 0 of the self-attention output is consumed downstream, so we
    # compute a single query per batch element. 1/sqrt(H) is pre-folded into
    # wq1/bq1 on the host.
    x0 = x[:, 0, :]                                                   # (Bt, H)
    q0 = (jnp.dot(x0, wq1_ref[...], preferred_element_type=jnp.float32)
          + bq1_ref[...])[:, None, :]                                 # (Bt,1,H)

    kv = (jnp.dot(x.reshape(Bt * Se, H), wkv1_ref[...],
                  preferred_element_type=jnp.float32)
          + bkv1_ref[...])                                            # (Bt*Se,2H)
    k = kv[:, :H].reshape(Bt, Se, H)
    v = kv[:, H:].reshape(Bt, Se, H)

    s1 = jnp.einsum('bqd,bkd->bqk', q0, k,
                    preferred_element_type=jnp.float32)               # (Bt,1,Se)
    w1 = _softmax_last(s1)
    r0 = jnp.einsum('bqk,bkd->bqd', w1, v,
                    preferred_element_type=jnp.float32)[:, 0, :]      # (Bt,H)

    # ---- ResponsePromptAttention: r0 (query) attends over the prompt --------
    z = (jnp.dot(r0, wq2_ref[...], preferred_element_type=jnp.float32)
         + bq2_ref[...])[:, None, :]                                  # (Bt,1,H)
    kvp = (jnp.dot(p.reshape(Bt * Sp, H), wkv2_ref[...],
                   preferred_element_type=jnp.float32)
           + bkv2_ref[...])                                           # (Bt*Sp,2H)
    kp = kvp[:, :H].reshape(Bt, Sp, H)
    vp = kvp[:, H:].reshape(Bt, Sp, H)

    s2 = jnp.einsum('bqd,bkd->bqk', z, kp,
                    preferred_element_type=jnp.float32)               # (Bt,1,Sp)
    w2 = _softmax_last(s2)
    pattn = jnp.einsum('bqk,bkd->bqd', w2, vp,
                       preferred_element_type=jnp.float32)[:, 0, :]   # (Bt,H)

    # ---- regression head: split wreg instead of concatenating features ------
    # (dropout p=0.2 is identity in eval mode)
    wreg = wreg_ref[...]                                              # (2H, 128)
    score = (jnp.dot(pattn, wreg[:H, :], preferred_element_type=jnp.float32)
             + jnp.dot(r0, wreg[H:, :], preferred_element_type=jnp.float32)
             + breg_ref[...])                                         # (Bt, 128)
    score_ref[...] = score                                            # lane-dense store


def dual_attention_forward(essay_emb, prompt_emb, params, block_b=8):
    B, Se, H = essay_emb.shape
    _, Sp, _ = prompt_emb.shape
    inv_scale = 1.0 / (float(H) ** 0.5)

    # batch tiling: Bt elements per grid step (pad batch so Bt divides it)
    Bt = min(block_b, B)
    n_blocks = (B + Bt - 1) // Bt
    B_pad = n_blocks * Bt
    if B_pad != B:
        pad = ((0, B_pad - B), (0, 0), (0, 0))
        essay_emb = jnp.pad(essay_emb, pad)
        prompt_emb = jnp.pad(prompt_emb, pad)

    # host-side weight prep (tiny matrices, done once per call):
    #   * fold 1/sqrt(H) into query weights/biases,
    #   * fuse K|V projection weights & biases,
    #   * zero-pad regression head to 128 output lanes.
    wq1 = params["wq1"] * inv_scale
    bq1 = params["bq1"] * inv_scale
    wq2 = params["wq2"] * inv_scale
    bq2 = params["bq2"] * inv_scale
    wkv1 = jnp.concatenate([params["wk1"], params["wv1"]], axis=1)      # (H, 2H)
    bkv1 = jnp.concatenate([params["bk1"], params["bv1"]], axis=1)      # (1, 2H)
    wkv2 = jnp.concatenate([params["wk2"], params["wv2"]], axis=1)      # (H, 2H)
    bkv2 = jnp.concatenate([params["bk2"], params["bv2"]], axis=1)      # (1, 2H)
    wreg_pad = jnp.zeros((2 * H, OUT_PAD), jnp.float32).at[:, :OUT_DIM].set(params["wreg"])
    breg_pad = jnp.zeros((1, OUT_PAD), jnp.float32).at[:, :OUT_DIM].set(params["breg"])

    full2d = lambda shape: pl.BlockSpec(shape, lambda i: (0, 0))
    in_specs = [
        pl.BlockSpec((Bt, Se, H), lambda i: (i, 0, 0)),   # essay embeddings
        pl.BlockSpec((Bt, Sp, H), lambda i: (i, 0, 0)),   # prompt embeddings
        full2d((H, H)), full2d((1, H)),                   # wq1, bq1 (pre-scaled)
        full2d((H, 2 * H)), full2d((1, 2 * H)),           # wkv1, bkv1 (fused)
        full2d((H, H)), full2d((1, H)),                   # wq2, bq2 (pre-scaled)
        full2d((H, 2 * H)), full2d((1, 2 * H)),           # wkv2, bkv2 (fused)
        full2d((2 * H, OUT_PAD)), full2d((1, OUT_PAD)),   # regression W / b (padded)
    ]
    out_spec = pl.BlockSpec((Bt, OUT_PAD), lambda i: (i, 0))

    score = pl.pallas_call(
        _dual_attention_kernel,
        out_shape=jax.ShapeDtypeStruct((B_pad, OUT_PAD), jnp.float32),
        grid_spec=pltpu.PrefetchScalarGridSpec(
            num_scalar_prefetch=0,
            grid=(n_blocks,),
            in_specs=in_specs,
            out_specs=out_spec,
        ),
        compiler_params=pltpu.CompilerParams(dimension_semantics=("parallel",)),
    )(
        essay_emb, prompt_emb,
        wq1, bq1, wkv1, bkv1,
        wq2, bq2, wkv2, bkv2,
        wreg_pad, breg_pad,
    )
    return score[:B, :OUT_DIM]   # (B, 4)


# ----------------------------------------------------------------------------
# Glue: deterministic synthetic "BERT" embedding + parameter init
# ----------------------------------------------------------------------------
def synthetic_bert_embed(input_ids, attention_mask, token_type_ids, params):
    # TODO(synk): pretrained BertModel encoder has no in-script equivalent; it is
    # replaced by a deterministic word+segment+position embedding stand-in that
    # produces last_hidden_state-shaped features [B, S, H].
    # TODO(synk): at real shapes, fuse this gather into the kernel (scalar-
    # prefetch token ids + DMA-gather rows) instead of materializing [B,S,H].
    word = params["word_emb"][input_ids]                        # (B, S, H)
    seg = params["seg_emb"][token_type_ids]                     # (B, S, H)
    pos = params["pos_emb"][None, : input_ids.shape[1], :]      # (1, S, H)
    emb = word + seg + pos
    return emb * attention_mask[..., None].astype(emb.dtype)


def init_params(key, hidden=HIDDEN):
    keys = jax.random.split(key, 20)
    n = lambda i, shape, s=0.02: (s * jax.random.normal(keys[i], shape)).astype(jnp.float32)
    return {
        # stand-in embedding tables
        "word_emb": n(0, (VOCAB, hidden)),
        "seg_emb": n(1, (N_TYPES, hidden)),
        "pos_emb": n(2, (MAX_POS, hidden)),
        # ResponseAttention
        "wq1": n(3, (hidden, hidden)), "bq1": n(4, (1, hidden)),
        "wk1": n(5, (hidden, hidden)), "bk1": n(6, (1, hidden)),
        "wv1": n(7, (hidden, hidden)), "bv1": n(8, (1, hidden)),
        # ResponsePromptAttention
        "wq2": n(9, (hidden, hidden)), "bq2": n(10, (1, hidden)),
        "wk2": n(11, (hidden, hidden)), "bk2": n(12, (1, hidden)),
        "wv2": n(13, (hidden, hidden)), "bv2": n(14, (1, hidden)),
        # regression head: Linear(2*hidden, 4)
        "wreg": n(15, (2 * hidden, 4)), "breg": n(16, (1, 4)),
    }


def model_forward(params, essay_ids, essay_mask, essay_types,
                  topic_ids, topic_mask, topic_types):
    essay_emb = synthetic_bert_embed(essay_ids, essay_mask, essay_types, params)
    prompt_emb = synthetic_bert_embed(topic_ids, topic_mask, topic_types, params)
    return dual_attention_forward(essay_emb, prompt_emb, params)


# ----------------------------------------------------------------------------
# Pure-JAX reference of the post-BERT forward (for correctness check).
# Mirrors the PyTorch module exactly (full self-attention, then row 0) so it
# also validates the in-kernel row-0-query rewrite.
# ----------------------------------------------------------------------------
def ref_forward(essay_emb, prompt_emb, p):
    H = essay_emb.shape[-1]
    scale = jnp.sqrt(jnp.float32(H))

    def softmax(s):
        s = s - jnp.max(s, axis=-1, keepdims=True)
        e = jnp.exp(s)
        return e / jnp.sum(e, axis=-1, keepdims=True)

    q = essay_emb @ p["wq1"] + p["bq1"]
    k = essay_emb @ p["wk1"] + p["bk1"]
    v = essay_emb @ p["wv1"] + p["bv1"]
    w = softmax(jnp.einsum("bqd,bkd->bqk", q, k) / scale)
    resp = jnp.einsum("bqk,bkd->bqd", w, v)
    resp0 = resp[:, 0:1, :]

    z = resp0 @ p["wq2"] + p["bq2"]
    kp = prompt_emb @ p["wk2"] + p["bk2"]
    vp = prompt_emb @ p["wv2"] + p["bv2"]
    w2 = softmax(jnp.einsum("bqd,bkd->bqk", z, kp) / scale)
    pattn = jnp.einsum("bqk,bkd->bqd", w2, vp)[:, 0, :]

    feat = jnp.concatenate([pattn, resp0[:, 0, :]], axis=-1)
    return feat @ p["wreg"] + p["breg"]


if __name__ == "__main__":
    B, S_ESSAY, S_TOPIC = 2, 8, 8
    key = jax.random.PRNGKey(0)
    k_param, k_e, k_t = jax.random.split(key, 3)

    params = init_params(k_param)

    essay_ids = jax.random.randint(k_e, (B, S_ESSAY), 0, VOCAB)
    topic_ids = jax.random.randint(k_t, (B, S_TOPIC), 0, VOCAB)
    essay_mask = jnp.ones((B, S_ESSAY), dtype=jnp.int32)
    topic_mask = jnp.ones((B, S_TOPIC), dtype=jnp.int32)
    essay_types = jnp.zeros((B, S_ESSAY), dtype=jnp.int32)
    topic_types = jnp.zeros((B, S_TOPIC), dtype=jnp.int32)

    score = model_forward(params, essay_ids, essay_mask, essay_types,
                          topic_ids, topic_mask, topic_types)
    score = jax.block_until_ready(score)
    assert score.shape == (B, 4), score.shape

    # correctness check against pure-JAX reference of the post-BERT forward
    # (tolerance loosened slightly for the approx-reciprocal softmax denom)
    essay_emb = synthetic_bert_embed(essay_ids, essay_mask, essay_types, params)
    prompt_emb = synthetic_bert_embed(topic_ids, topic_mask, topic_types, params)
    ref = jax.block_until_ready(ref_forward(essay_emb, prompt_emb, params))
    assert jnp.allclose(score, ref, atol=2e-3, rtol=2e-3), (score, ref)

    print("KERNEL_OK")
</pallas_src>

<mosaic_0001>
module attributes {stable_mosaic.version = 11 : i64} {
  func.func @_dual_attention_kernel(%arg0: i32, %arg1: memref<2x8x32xf32, #tpu.memory_space<vmem>>, %arg2: memref<2x8x32xf32, #tpu.memory_space<vmem>>, %arg3: memref<32x32xf32, #tpu.memory_space<vmem>>, %arg4: memref<1x32xf32, #tpu.memory_space<vmem>>, %arg5: memref<32x64xf32, #tpu.memory_space<vmem>>, %arg6: memref<1x64xf32, #tpu.memory_space<vmem>>, %arg7: memref<32x32xf32, #tpu.memory_space<vmem>>, %arg8: memref<1x32xf32, #tpu.memory_space<vmem>>, %arg9: memref<32x64xf32, #tpu.memory_space<vmem>>, %arg10: memref<1x64xf32, #tpu.memory_space<vmem>>, %arg11: memref<64x128xf32, #tpu.memory_space<vmem>>, %arg12: memref<1x128xf32, #tpu.memory_space<vmem>>, %arg13: memref<2x128xf32, #tpu.memory_space<vmem>>) attributes {dimension_semantics = [#tpu.dimension_semantics<parallel>], iteration_bounds = array<i64: 1>, scalar_prefetch = 0 : i64, scratch_operands = 0 : i64, tpu.core_type = #tpu.core_type<tc>, window_params = [{transform_indices = @transform_0, window_bounds = array<i64: 2, 8, 32>}, {transform_indices = @transform_1, window_bounds = array<i64: 2, 8, 32>}, {pipeline_mode = #tpu.pipeline_mode<synchronous>, transform_indices = @transform_2, window_bounds = array<i64: 32, 32>}, {pipeline_mode = #tpu.pipeline_mode<synchronous>, transform_indices = @transform_3, window_bounds = array<i64: 1, 32>}, {pipeline_mode = #tpu.pipeline_mode<synchronous>, transform_indices = @transform_4, window_bounds = array<i64: 32, 64>}, {pipeline_mode = #tpu.pipeline_mode<synchronous>, transform_indices = @transform_5, window_bounds = array<i64: 1, 64>}, {pipeline_mode = #tpu.pipeline_mode<synchronous>, transform_indices = @transform_6, window_bounds = array<i64: 32, 32>}, {pipeline_mode = #tpu.pipeline_mode<synchronous>, transform_indices = @transform_7, window_bounds = array<i64: 1, 32>}, {pipeline_mode = #tpu.pipeline_mode<synchronous>, transform_indices = @transform_8, window_bounds = array<i64: 32, 64>}, {pipeline_mode = #tpu.pipeline_mode<synchronous>, transform_indices = @transform_9, window_bounds = array<i64: 1, 64>}, {pipeline_mode = #tpu.pipeline_mode<synchronous>, transform_indices = @transform_10, window_bounds = array<i64: 64, 128>}, {pipeline_mode = #tpu.pipeline_mode<synchronous>, transform_indices = @transform_11, window_bounds = array<i64: 1, 128>}, {transform_indices = @transform_12, window_bounds = array<i64: 2, 128>}]} {
    %c0 = arith.constant 0 : index
    %c0_0 = arith.constant 0 : index
    %c0_1 = arith.constant 0 : index
    %0 = vector.load %arg1[%c0, %c0_0, %c0_1] : memref<2x8x32xf32, #tpu.memory_space<vmem>>, vector<2x8x32xf32>
    %c0_2 = arith.constant 0 : index
    %c0_3 = arith.constant 0 : index
    %c0_4 = arith.constant 0 : index
    %1 = vector.load %arg2[%c0_2, %c0_3, %c0_4] : memref<2x8x32xf32, #tpu.memory_space<vmem>>, vector<2x8x32xf32>
    %2 = vector.extract_strided_slice %0 {offsets = [0, 0, 0], sizes = [2, 1, 32], strides = [1, 1, 1]} : vector<2x8x32xf32> to vector<2x1x32xf32>
    %3 = vector.shape_cast %2 : vector<2x1x32xf32> to vector<2x32xf32>
    %c0_5 = arith.constant 0 : index
    %c0_6 = arith.constant 0 : index
    %4 = vector.load %arg3[%c0_5, %c0_6] : memref<32x32xf32, #tpu.memory_space<vmem>>, vector<32x32xf32>
    %cst = arith.constant dense<0.000000e+00> : vector<2x32xf32>
    %5 = tpu.matmul %3, %4, %cst {dimension_numbers = #tpu.dot_dimension_numbers<[1], [0], [0], [1], [0, 0, 1, 1], [], []>} : vector<2x32xf32>, vector<32x32xf32>, vector<2x32xf32> -> vector<2x32xf32>
    %c0_7 = arith.constant 0 : index
    %c0_8 = arith.constant 0 : index
    %6 = vector.load %arg4[%c0_7, %c0_8] : memref<1x32xf32, #tpu.memory_space<vmem>>, vector<1x32xf32>
    %7 = vector.broadcast %6 : vector<1x32xf32> to vector<2x32xf32>
    %8 = arith.addf %5, %7 : vector<2x32xf32>
    %9 = vector.shape_cast %8 : vector<2x32xf32> to vector<2x1x32xf32>
    %10 = vector.shape_cast %0 : vector<2x8x32xf32> to vector<16x32xf32>
    %c0_9 = arith.constant 0 : index
    %c0_10 = arith.constant 0 : index
    %11 = vector.load %arg5[%c0_9, %c0_10] : memref<32x64xf32, #tpu.memory_space<vmem>>, vector<32x64xf32>
    %cst_11 = arith.constant dense<0.000000e+00> : vector<16x64xf32>
    %12 = tpu.matmul %10, %11, %cst_11 {dimension_numbers = #tpu.dot_dimension_numbers<[1], [0], [0], [1], [0, 0, 1, 1], [], []>} : vector<16x32xf32>, vector<32x64xf32>, vector<16x64xf32> -> vector<16x64xf32>
    %c0_12 = arith.constant 0 : index
    %c0_13 = arith.constant 0 : index
    %13 = vector.load %arg6[%c0_12, %c0_13] : memref<1x64xf32, #tpu.memory_space<vmem>>, vector<1x64xf32>
    %14 = vector.broadcast %13 : vector<1x64xf32> to vector<16x64xf32>
    %15 = arith.addf %12, %14 : vector<16x64xf32>
    %16 = vector.extract_strided_slice %15 {offsets = [0, 0], sizes = [16, 32], strides = [1, 1]} : vector<16x64xf32> to vector<16x32xf32>
    %17 = vector.shape_cast %16 : vector<16x32xf32> to vector<2x8x32xf32>
    %18 = vector.extract_strided_slice %15 {offsets = [0, 32], sizes = [16, 32], strides = [1, 1]} : vector<16x64xf32> to vector<16x32xf32>
    %19 = vector.shape_cast %18 : vector<16x32xf32> to vector<2x8x32xf32>
    "tpu.trace_start"() <{level = 10 : i32, message = "bqd,bkd->bqk"}> : () -> ()
    %cst_14 = arith.constant dense<0.000000e+00> : vector<2x1x8xf32>
    %20 = tpu.matmul %9, %17, %cst_14 {dimension_numbers = #tpu.dot_dimension_numbers<[2], [2], [1], [1], [0, 0, 0, 1, 1, 1], [0], [0]>} : vector<2x1x32xf32>, vector<2x8x32xf32>, vector<2x1x8xf32> -> vector<2x1x8xf32>
    "tpu.trace_stop"() : () -> ()
    %cst_15 = arith.constant dense<0xFF800000> : vector<2x1xf32>
    %21 = vector.multi_reduction <maximumf>, %20, %cst_15 [2] : vector<2x1x8xf32> to vector<2x1xf32>
    %22 = vector.shape_cast %21 : vector<2x1xf32> to vector<2x1x1xf32>
    %23 = vector.broadcast %22 : vector<2x1x1xf32> to vector<2x1x8xf32>
    %24 = arith.subf %20, %23 : vector<2x1x8xf32>
    %25 = math.exp %24 : vector<2x1x8xf32>
    %cst_16 = arith.constant dense<0.000000e+00> : vector<2x1xf32>
    %26 = vector.multi_reduction <add>, %25, %cst_16 [2] : vector<2x1x8xf32> to vector<2x1xf32>
    %27 = vector.shape_cast %26 : vector<2x1xf32> to vector<2x1x1xf32>
    %28 = tpu.reciprocal %27 {approx = true} : vector<2x1x1xf32> -> vector<2x1x1xf32>
    %29 = vector.broadcast %28 : vector<2x1x1xf32> to vector<2x1x8xf32>
    %30 = arith.mulf %25, %29 : vector<2x1x8xf32>
    "tpu.trace_start"() <{level = 10 : i32, message = "bqk,bkd->bqd"}> : () -> ()
    %cst_17 = arith.constant dense<0.000000e+00> : vector<2x1x32xf32>
    %31 = tpu.matmul %30, %19, %cst_17 {dimension_numbers = #tpu.dot_dimension_numbers<[2], [1], [1], [2], [0, 0, 0, 1, 1, 2], [0], [0]>} : vector<2x1x8xf32>, vector<2x8x32xf32>, vector<2x1x32xf32> -> vector<2x1x32xf32>
    "tpu.trace_stop"() : () -> ()
    %32 = vector.shape_cast %31 : vector<2x1x32xf32> to vector<2x32xf32>
    %c0_18 = arith.constant 0 : index
    %c0_19 = arith.constant 0 : index
    %33 = vector.load %arg7[%c0_18, %c0_19] : memref<32x32xf32, #tpu.memory_space<vmem>>, vector<32x32xf32>
    %cst_20 = arith.constant dense<0.000000e+00> : vector<2x32xf32>
    %34 = tpu.matmul %32, %33, %cst_20 {dimension_numbers = #tpu.dot_dimension_numbers<[1], [0], [0], [1], [0, 0, 1, 1], [], []>} : vector<2x32xf32>, vector<32x32xf32>, vector<2x32xf32> -> vector<2x32xf32>
    %c0_21 = arith.constant 0 : index
    %c0_22 = arith.constant 0 : index
    %35 = vector.load %arg8[%c0_21, %c0_22] : memref<1x32xf32, #tpu.memory_space<vmem>>, vector<1x32xf32>
    %36 = vector.broadcast %35 : vector<1x32xf32> to vector<2x32xf32>
    %37 = arith.addf %34, %36 : vector<2x32xf32>
    %38 = vector.shape_cast %37 : vector<2x32xf32> to vector<2x1x32xf32>
    %39 = vector.shape_cast %1 : vector<2x8x32xf32> to vector<16x32xf32>
    %c0_23 = arith.constant 0 : index
    %c0_24 = arith.constant 0 : index
    %40 = vector.load %arg9[%c0_23, %c0_24] : memref<32x64xf32, #tpu.memory_space<vmem>>, vector<32x64xf32>
    %cst_25 = arith.constant dense<0.000000e+00> : vector<16x64xf32>
    %41 = tpu.matmul %39, %40, %cst_25 {dimension_numbers = #tpu.dot_dimension_numbers<[1], [0], [0], [1], [0, 0, 1, 1], [], []>} : vector<16x32xf32>, vector<32x64xf32>, vector<16x64xf32> -> vector<16x64xf32>
    %c0_26 = arith.constant 0 : index
    %c0_27 = arith.constant 0 : index
    %42 = vector.load %arg10[%c0_26, %c0_27] : memref<1x64xf32, #tpu.memory_space<vmem>>, vector<1x64xf32>
    %43 = vector.broadcast %42 : vector<1x64xf32> to vector<16x64xf32>
    %44 = arith.addf %41, %43 : vector<16x64xf32>
    %45 = vector.extract_strided_slice %44 {offsets = [0, 0], sizes = [16, 32], strides = [1, 1]} : vector<16x64xf32> to vector<16x32xf32>
    %46 = vector.shape_cast %45 : vector<16x32xf32> to vector<2x8x32xf32>
    %47 = vector.extract_strided_slice %44 {offsets = [0, 32], sizes = [16, 32], strides = [1, 1]} : vector<16x64xf32> to vector<16x32xf32>
    %48 = vector.shape_cast %47 : vector<16x32xf32> to vector<2x8x32xf32>
    "tpu.trace_start"() <{level = 10 : i32, message = "bqd,bkd->bqk"}> : () -> ()
    %cst_28 = arith.constant dense<0.000000e+00> : vector<2x1x8xf32>
    %49 = tpu.matmul %38, %46, %cst_28 {dimension_numbers = #tpu.dot_dimension_numbers<[2], [2], [1], [1], [0, 0, 0, 1, 1, 1], [0], [0]>} : vector<2x1x32xf32>, vector<2x8x32xf32>, vector<2x1x8xf32> -> vector<2x1x8xf32>
    "tpu.trace_stop"() : () -> ()
    %cst_29 = arith.constant dense<0xFF800000> : vector<2x1xf32>
    %50 = vector.multi_reduction <maximumf>, %49, %cst_29 [2] : vector<2x1x8xf32> to vector<2x1xf32>
    %51 = vector.shape_cast %50 : vector<2x1xf32> to vector<2x1x1xf32>
    %52 = vector.broadcast %51 : vector<2x1x1xf32> to vector<2x1x8xf32>
    %53 = arith.subf %49, %52 : vector<2x1x8xf32>
    %54 = math.exp %53 : vector<2x1x8xf32>
    %cst_30 = arith.constant dense<0.000000e+00> : vector<2x1xf32>
    %55 = vector.multi_reduction <add>, %54, %cst_30 [2] : vector<2x1x8xf32> to vector<2x1xf32>
    %56 = vector.shape_cast %55 : vector<2x1xf32> to vector<2x1x1xf32>
    %57 = tpu.reciprocal %56 {approx = true} : vector<2x1x1xf32> -> vector<2x1x1xf32>
    %58 = vector.broadcast %57 : vector<2x1x1xf32> to vector<2x1x8xf32>
    %59 = arith.mulf %54, %58 : vector<2x1x8xf32>
    "tpu.trace_start"() <{level = 10 : i32, message = "bqk,bkd->bqd"}> : () -> ()
    %cst_31 = arith.constant dense<0.000000e+00> : vector<2x1x32xf32>
    %60 = tpu.matmul %59, %48, %cst_31 {dimension_numbers = #tpu.dot_dimension_numbers<[2], [1], [1], [2], [0, 0, 0, 1, 1, 2], [0], [0]>} : vector<2x1x8xf32>, vector<2x8x32xf32>, vector<2x1x32xf32> -> vector<2x1x32xf32>
    "tpu.trace_stop"() : () -> ()
    %61 = vector.shape_cast %60 : vector<2x1x32xf32> to vector<2x32xf32>
    %c0_32 = arith.constant 0 : index
    %c0_33 = arith.constant 0 : index
    %62 = vector.load %arg11[%c0_32, %c0_33] : memref<64x128xf32, #tpu.memory_space<vmem>>, vector<64x128xf32>
    %63 = vector.extract_strided_slice %62 {offsets = [0, 0], sizes = [32, 128], strides = [1, 1]} : vector<64x128xf32> to vector<32x128xf32>
    %cst_34 = arith.constant dense<0.000000e+00> : vector<2x128xf32>
    %64 = tpu.matmul %61, %63, %cst_34 {dimension_numbers = #tpu.dot_dimension_numbers<[1], [0], [0], [1], [0, 0, 1, 1], [], []>} : vector<2x32xf32>, vector<32x128xf32>, vector<2x128xf32> -> vector<2x128xf32>
    %65 = vector.extract_strided_slice %62 {offsets = [32, 0], sizes = [32, 128], strides = [1, 1]} : vector<64x128xf32> to vector<32x128xf32>
    %cst_35 = arith.constant dense<0.000000e+00> : vector<2x128xf32>
    %66 = tpu.matmul %32, %65, %cst_35 {dimension_numbers = #tpu.dot_dimension_numbers<[1], [0], [0], [1], [0, 0, 1, 1], [], []>} : vector<2x32xf32>, vector<32x128xf32>, vector<2x128xf32> -> vector<2x128xf32>
    %67 = arith.addf %64, %66 : vector<2x128xf32>
    %c0_36 = arith.constant 0 : index
    %c0_37 = arith.constant 0 : index
    %68 = vector.load %arg12[%c0_36, %c0_37] : memref<1x128xf32, #tpu.memory_space<vmem>>, vector<1x128xf32>
    %69 = vector.broadcast %68 : vector<1x128xf32> to vector<2x128xf32>
    %70 = arith.addf %67, %69 : vector<2x128xf32>
    %c0_38 = arith.constant 0 : index
    %c0_39 = arith.constant 0 : index
    %71 = vector.load %arg13[%c0_38, %c0_39] : memref<2x128xf32, #tpu.memory_space<vmem>>, vector<2x128xf32>
    tpu.vector_store %arg13[%c0_38, %c0_39], %70 {strides = array<i32>} : memref<2x128xf32, #tpu.memory_space<vmem>>, vector<2x128xf32>,
    return
  }
  func.func @transform_0(%arg0: i32) -> (i32, i32, i32) {
    %c0_i32 = arith.constant 0 : i32
    %c0_i32_0 = arith.constant 0 : i32
    %c0_i32_1 = arith.constant 0 : i32
    return %arg0, %c0_i32, %c0_i32_0 : i32, i32, i32
  }
  func.func @transform_1(%arg0: i32) -> (i32, i32, i32) {
    %c0_i32 = arith.constant 0 : i32
    %c0_i32_0 = arith.constant 0 : i32
    %c0_i32_1 = arith.constant 0 : i32
    return %arg0, %c0_i32, %c0_i32_0 : i32, i32, i32
  }
  func.func @transform_2(%arg0: i32) -> (i32, i32) {
    %c0_i32 = arith.constant 0 : i32
    %c0_i32_0 = arith.constant 0 : i32
    %c0_i32_1 = arith.constant 0 : i32
    return %c0_i32, %c0_i32_0 : i32, i32
  }
  func.func @transform_3(%arg0: i32) -> (i32, i32) {
    %c0_i32 = arith.constant 0 : i32
    %c0_i32_0 = arith.constant 0 : i32
    %c0_i32_1 = arith.constant 0 : i32
    return %c0_i32, %c0_i32_0 : i32, i32
  }
  func.func @transform_4(%arg0: i32) -> (i32, i32) {
    %c0_i32 = arith.constant 0 : i32
    %c0_i32_0 = arith.constant 0 : i32
    %c0_i32_1 = arith.constant 0 : i32
    return %c0_i32, %c0_i32_0 : i32, i32
  }
  func.func @transform_5(%arg0: i32) -> (i32, i32) {
    %c0_i32 = arith.constant 0 : i32
    %c0_i32_0 = arith.constant 0 : i32
    %c0_i32_1 = arith.constant 0 : i32
    return %c0_i32, %c0_i32_0 : i32, i32
  }
  func.func @transform_6(%arg0: i32) -> (i32, i32) {
    %c0_i32 = arith.constant 0 : i32
    %c0_i32_0 = arith.constant 0 : i32
    %c0_i32_1 = arith.constant 0 : i32
    return %c0_i32, %c0_i32_0 : i32, i32
  }
  func.func @transform_7(%arg0: i32) -> (i32, i32) {
    %c0_i32 = arith.constant 0 : i32
    %c0_i32_0 = arith.constant 0 : i32
    %c0_i32_1 = arith.constant 0 : i32
    return %c0_i32, %c0_i32_0 : i32, i32
  }
  func.func @transform_8(%arg0: i32) -> (i32, i32) {
    %c0_i32 = arith.constant 0 : i32
    %c0_i32_0 = arith.constant 0 : i32
    %c0_i32_1 = arith.constant 0 : i32
    return %c0_i32, %c0_i32_0 : i32, i32
  }
  func.func @transform_9(%arg0: i32) -> (i32, i32) {
    %c0_i32 = arith.constant 0 : i32
    %c0_i32_0 = arith.constant 0 : i32
    %c0_i32_1 = arith.constant 0 : i32
    return %c0_i32, %c0_i32_0 : i32, i32
  }
  func.func @transform_10(%arg0: i32) -> (i32, i32) {
    %c0_i32 = arith.constant 0 : i32
    %c0_i32_0 = arith.constant 0 : i32
    %c0_i32_1 = arith.constant 0 : i32
    return %c0_i32, %c0_i32_0 : i32, i32
  }
  func.func @transform_11(%arg0: i32) -> (i32, i32) {
    %c0_i32 = arith.constant 0 : i32
    %c0_i32_0 = arith.constant 0 : i32
    %c0_i32_1 = arith.constant 0 : i32
    return %c0_i32, %c0_i32_0 : i32, i32
  }
  func.func @transform_12(%arg0: i32) -> (i32, i32) {
    %c0_i32 = arith.constant 0 : i32
    %c0_i32_0 = arith.constant 0 : i32
    return %arg0, %c0_i32 : i32, i32
  }
}

</mosaic_0001>

<llo_original>
// kernel: tpu_custom_call.1
$region0: #{tpu_custom_call.1}
  #allocation0 [shape = 'u32[]', space=smem, size = 0x4, offset = 0x4, fixed_abs, tag = 'smem constant byte address 0x4 - core index']
  #allocation1 [shape = 'u32[72,128]{1,0:T(1,128)}', space=vmem, size = 0x9000, scoped, tag = 'internal scratch']
  %s0 = inlined_call_operand.hbm [shape: f32[2,8,32], index: 0, kind: input, shape index: {}]
  %s1 = inlined_call_operand.hbm [shape: f32[2,8,32], index: 1, kind: input, shape index: {}]
  %s2 = inlined_call_operand.hbm [shape: f32[32,32], index: 2, kind: input, shape index: {}]
  %s3 = inlined_call_operand.vmem [shape: f32[1,32], index: 3, kind: input, shape index: {}]
  %s4 = inlined_call_operand.hbm [shape: f32[32,64], index: 4, kind: input, shape index: {}]
  %s5 = inlined_call_operand.vmem [shape: f32[1,64], index: 5, kind: input, shape index: {}]
  %s6 = inlined_call_operand.hbm [shape: f32[32,32], index: 6, kind: input, shape index: {}]
  %s7 = inlined_call_operand.vmem [shape: f32[1,32], index: 7, kind: input, shape index: {}]
  %s8 = inlined_call_operand.hbm [shape: f32[32,64], index: 8, kind: input, shape index: {}]
  %s9 = inlined_call_operand.vmem [shape: f32[1,64], index: 9, kind: input, shape index: {}]
  %s10 = inlined_call_operand.hbm [shape: f32[64,128], index: 10, kind: input, shape index: {}]
  %s11 = inlined_call_operand.vmem [shape: f32[1,128], index: 11, kind: input, shape index: {}]
  %s12 = inlined_call_operand.hbm [shape: f32[2,128], index: 12, kind: output, shape index: {}]
  %s13 = sld [smem:[#allocation0]]
  $region86: #{tpu_custom_call.1} parent=0
    _
  %s15 = ssub.s32 1, %s13
  %s16 = scalar_select 0, %s15, %s13
  $region1: #{tpu_custom_call.1} parent=0
    #allocation2 [shape = 'u8[8192]{0}', space=vmem, size = 0x2000, scoped, tag = 'input window, operand 0, single buffered']
    #allocation3 [shape = 's32[1]{0}', space=sflag, size = 0x4, scoped, tag = 'scoped memory for tpu_custom_call.1']
    #allocation4 [shape = 's32[1]{0}', space=sflag, size = 0x4, scoped, tag = 'scoped memory for tpu_custom_call.1']
    #allocation5 [shape = 'u8[8192]{0}', space=vmem, size = 0x2000, scoped, tag = 'input window, operand 1, single buffered']
    #allocation6 [shape = 's32[1]{0}', space=sflag, size = 0x4, scoped, tag = 'scoped memory for tpu_custom_call.1']
    #allocation7 [shape = 'u8[16384]{0}', space=vmem, size = 0x4000, scoped, tag = 'input window, operand 2, single buffered']
    #allocation8 [shape = 'u8[16384]{0}', space=vmem, size = 0x4000, scoped, tag = 'input window, operand 4, single buffered']
    #allocation9 [shape = 's32[1]{0}', space=sflag, size = 0x4, scoped, tag = 'scoped memory for tpu_custom_call.1']
    #allocation10 [shape = 'u8[16384]{0}', space=vmem, size = 0x4000, scoped, tag = 'input window, operand 6, single buffered']
    #allocation11 [shape = 'u8[16384]{0}', space=vmem, size = 0x4000, scoped, tag = 'input window, operand 8, single buffered']
    #allocation12 [shape = 's32[1]{0}', space=sflag, size = 0x4, scoped, tag = 'scoped memory for tpu_custom_call.1']
    #allocation13 [shape = 'u8[32768]{0}', space=vmem, size = 0x8000, scoped, tag = 'input window, operand 10, single buffered']
    #allocation14 [shape = 'u8[1024]{0}', space=vmem, size = 0x400, scoped, tag = 'output window, operand 0, single buffered']
    %17 = vsyncpa [#allocation3], 0
    %18 = vsyncpa [#allocation6], 0
    %19 = vsyncpa [#allocation9], 0
    %20 = vsyncpa [#allocation12], 0
    %21 = vsyncpa [#allocation4], 0
    // Predicated region
    $region2: #{tpu_custom_call.1} parent=1 // pred_check
      _
    $region3: #{tpu_custom_call.1} parent=1 // pred_check_branch
      %23 = sbr.rel (0) target = $region5
    $region4: #{tpu_custom_call.1} parent=1 // pred_region
      %25 = vsyncadd [#allocation3], 0
      %s26 = sshll.u32 %s0, 4
      %s27 = int_to_ptr.hbm [resolvable:$true] %s26
      %s28 = sshll.u32 [#allocation2], 4
      %s29 = int_to_ptr.vmem [resolvable:$true] %s28
      %34 = dma.hbm_to_vmem [thread:$0]  %s27, 256, %s29, [#allocation3], 128, 128, 8
    $region5: #{tpu_custom_call.1} parent=1 // pred_fallthru
      _
    // Predicated region
    $region6: #{tpu_custom_call.1} parent=1 // pred_check
      _
    $region7: #{tpu_custom_call.1} parent=1 // pred_check_branch
      %36 = sbr.rel (0) target = $region9
    $region8: #{tpu_custom_call.1} parent=1 // pred_region
      %38 = vsyncadd [#allocation6], 0
      %s39 = sshll.u32 %s1, 4
      %s40 = int_to_ptr.hbm [resolvable:$true] %s39
      %s41 = sshll.u32 [#allocation5], 4
      %s42 = int_to_ptr.vmem [resolvable:$true] %s41
      %47 = dma.hbm_to_vmem [thread:$0]  %s40, 256, %s42, [#allocation6], 128, 128, 8
    $region9: #{tpu_custom_call.1} parent=1 // pred_fallthru
      _
    // Predicated region
    $region10: #{tpu_custom_call.1} parent=1 // pred_check
      _
    $region11: #{tpu_custom_call.1} parent=1 // pred_check_branch
      %49 = sbr.rel (0) target = $region13
    $region12: #{tpu_custom_call.1} parent=1 // pred_region
      %51 = vsyncadd [#allocation6], 0
      %s52 = sshll.u32 %s2, 4
      %s53 = int_to_ptr.hbm [resolvable:$true] %s52
      %s54 = sshll.u32 [#allocation7], 4
      %s55 = int_to_ptr.vmem [resolvable:$true] %s54
      %60 = dma.hbm_to_vmem [thread:$0]  %s53, 512, %s55, [#allocation6], 128, 128, 8
    $region13: #{tpu_custom_call.1} parent=1 // pred_fallthru
      _
    // Predicated region
    $region14: #{tpu_custom_call.1} parent=1 // pred_check
      _
    $region15: #{tpu_custom_call.1} parent=1 // pred_check_branch
      %62 = sbr.rel (0) target = $region17
    $region16: #{tpu_custom_call.1} parent=1 // pred_region
      _
    $region17: #{tpu_custom_call.1} parent=1 // pred_fallthru
      _
    // Predicated region
    $region18: #{tpu_custom_call.1} parent=1 // pred_check
      _
    $region19: #{tpu_custom_call.1} parent=1 // pred_check_branch
      %64 = sbr.rel (0) target = $region21
    $region20: #{tpu_custom_call.1} parent=1 // pred_region
      %66 = vsyncadd [#allocation9], 0
      %s67 = sshll.u32 %s4, 4
      %s68 = int_to_ptr.hbm [resolvable:$true] %s67
      %s69 = sshll.u32 [#allocation8], 4
      %s70 = int_to_ptr.vmem [resolvable:$true] %s69
      %75 = dma.hbm_to_vmem [thread:$0]  %s68, 512, %s70, [#allocation9], 128, 128, 8
    $region21: #{tpu_custom_call.1} parent=1 // pred_fallthru
      _
    // Predicated region
    $region22: #{tpu_custom_call.1} parent=1 // pred_check
      _
    $region23: #{tpu_custom_call.1} parent=1 // pred_check_branch
      %77 = sbr.rel (0) target = $region25
    $region24: #{tpu_custom_call.1} parent=1 // pred_region
      _
    $region25: #{tpu_custom_call.1} parent=1 // pred_fallthru
      _
    // Predicated region
    $region26: #{tpu_custom_call.1} parent=1 // pred_check
      _
    $region27: #{tpu_custom_call.1} parent=1 // pred_check_branch
      %79 = sbr.rel (0) target = $region29
    $region28: #{tpu_custom_call.1} parent=1 // pred_region
      %81 = vsyncadd [#allocation9], 0
      %s82 = sshll.u32 %s6, 4
      %s83 = int_to_ptr.hbm [resolvable:$true] %s82
      %s84 = sshll.u32 [#allocation10], 4
      %s85 = int_to_ptr.vmem [resolvable:$true] %s84
      %90 = dma.hbm_to_vmem [thread:$0]  %s83, 512, %s85, [#allocation9], 128, 128, 8
    $region29: #{tpu_custom_call.1} parent=1 // pred_fallthru
      _
    // Predicated region
    $region30: #{tpu_custom_call.1} parent=1 // pred_check
      _
    $region31: #{tpu_custom_call.1} parent=1 // pred_check_branch
      %92 = sbr.rel (0) target = $region33
    $region32: #{tpu_custom_call.1} parent=1 // pred_region
      _
    $region33: #{tpu_custom_call.1} parent=1 // pred_fallthru
      _
    // Predicated region
    $region34: #{tpu_custom_call.1} parent=1 // pred_check
      _
    $region35: #{tpu_custom_call.1} parent=1 // pred_check_branch
      %94 = sbr.rel (0) target = $region37
    $region36: #{tpu_custom_call.1} parent=1 // pred_region
      %96 = vsyncadd [#allocation12], 0
      %s97 = sshll.u32 %s8, 4
      %s98 = int_to_ptr.hbm [resolvable:$true] %s97
      %s99 = sshll.u32 [#allocation11], 4
      %s100 = int_to_ptr.vmem [resolvable:$true] %s99
      %105 = dma.hbm_to_vmem [thread:$0]  %s98, 512, %s100, [#allocation12], 128, 128, 8
    $region37: #{tpu_custom_call.1} parent=1 // pred_fallthru
      _
    // Predicated region
    $region38: #{tpu_custom_call.1} parent=1 // pred_check
      _
    $region39: #{tpu_custom_call.1} parent=1 // pred_check_branch
      %107 = sbr.rel (0) target = $region41
    $region40: #{tpu_custom_call.1} parent=1 // pred_region
      _
    $region41: #{tpu_custom_call.1} parent=1 // pred_fallthru
      _
    // Predicated region
    $region42: #{tpu_custom_call.1} parent=1 // pred_check
      _
    $region43: #{tpu_custom_call.1} parent=1 // pred_check_branch
      %109 = sbr.rel (0) target = $region45
    $region44: #{tpu_custom_call.1} parent=1 // pred_region
      %111 = vsyncadd [#allocation12], 0
      %s112 = sshll.u32 %s10, 4
      %s113 = int_to_ptr.hbm [resolvable:$true] %s112
      %s114 = sshll.u32 [#allocation13], 4
      %s115 = int_to_ptr.vmem [resolvable:$true] %s114
      %120 = dma.hbm_to_vmem [thread:$0]  %s113, 1024, %s115, [#allocation12], 128, 128, 8
    $region45: #{tpu_custom_call.1} parent=1 // pred_fallthru
      _
    // Predicated region
    $region46: #{tpu_custom_call.1} parent=1 // pred_check
      _
    $region47: #{tpu_custom_call.1} parent=1 // pred_check_branch
      %122 = sbr.rel (0) target = $region49
    $region48: #{tpu_custom_call.1} parent=1 // pred_region
      _
    $region49: #{tpu_custom_call.1} parent=1 // pred_fallthru
      _
    // Predicated region
    $region50: #{tpu_custom_call.1} parent=1 // pred_check
      _
    $region51: #{tpu_custom_call.1} parent=1 // pred_check_branch
      %124 = sbr.rel (0) target = $region53
    $region52: #{tpu_custom_call.1} parent=1 // pred_region
      %126 = dma.done [#allocation3], 256
    $region53: #{tpu_custom_call.1} parent=1 // pred_fallthru
      _
    // Predicated region
    $region54: #{tpu_custom_call.1} parent=1 // pred_check
      _
    $region55: #{tpu_custom_call.1} parent=1 // pred_check_branch
      %128 = sbr.rel (0) target = $region57
    $region56: #{tpu_custom_call.1} parent=1 // pred_region
      %130 = dma.done [#allocation6], 256
    $region57: #{tpu_custom_call.1} parent=1 // pred_fallthru
      _
    // Predicated region
    $region58: #{tpu_custom_call.1} parent=1 // pred_check
      _
    $region59: #{tpu_custom_call.1} parent=1 // pred_check_branch
      %132 = sbr.rel (0) target = $region61
    $region60: #{tpu_custom_call.1} parent=1 // pred_region
      %134 = dma.done [#allocation6], 512
    $region61: #{tpu_custom_call.1} parent=1 // pred_fallthru
      _
    // Predicated region
    $region62: #{tpu_custom_call.1} parent=1 // pred_check
      _
    $region63: #{tpu_custom_call.1} parent=1 // pred_check_branch
      %136 = sbr.rel (0) target = $region65
    $region64: #{tpu_custom_call.1} parent=1 // pred_region
      %138 = dma.done [#allocation9], 512
    $region65: #{tpu_custom_call.1} parent=1 // pred_fallthru
      _
    // Predicated region
    $region66: #{tpu_custom_call.1} parent=1 // pred_check
      _
    $region67: #{tpu_custom_call.1} parent=1 // pred_check_branch
      %140 = sbr.rel (0) target = $region69
    $region68: #{tpu_custom_call.1} parent=1 // pred_region
      %142 = dma.done [#allocation9], 512
    $region69: #{tpu_custom_call.1} parent=1 // pred_fallthru
      _
    // Predicated region
    $region70: #{tpu_custom_call.1} parent=1 // pred_check
      _
    $region71: #{tpu_custom_call.1} parent=1 // pred_check_branch
      %144 = sbr.rel (0) target = $region73
    $region72: #{tpu_custom_call.1} parent=1 // pred_region
      %146 = dma.done [#allocation12], 512
    $region73: #{tpu_custom_call.1} parent=1 // pred_fallthru
      _
    // Predicated region
    $region74: #{tpu_custom_call.1} parent=1 // pred_check
      _
    $region75: #{tpu_custom_call.1} parent=1 // pred_check_branch
      %148 = sbr.rel (0) target = $region77
    $region76: #{tpu_custom_call.1} parent=1 // pred_region
      %150 = dma.done [#allocation12], 1024
    $region77: #{tpu_custom_call.1} parent=1 // pred_fallthru
      _
    %v151 = vld [vmem:[#allocation2] sm:$0xff]
    %v152 = vld [vmem:[#allocation2 + $0x8] sm:$0xff]
    %v153 = vld [vmem:[#allocation5] sm:$0xff]
    %v154 = vld [vmem:[#allocation5 + $0x8] sm:$0xff]
    %v155 = vld [vmem:[#allocation7] sm:$0xff]
    %v156 = vld [vmem:[#allocation7 + $0x8] sm:$0xff]
    %v157 = vld [vmem:[#allocation7 + $0x10] sm:$0xff]
    %v158 = vld [vmem:[#allocation7 + $0x18] sm:$0xff]
    %v159 = vld [vmem:[%s3] sm:$0x1]
    %v161 = vperm.slane %v159, 0
    %v165 = vrot.slane %v152, 7
    %vm166 = vcmask 1041409
    %v167 = vsel %vm166, %v165, %v151
    %vm168 = vcmask 261120
    %v169 = vsel %vm168, %v167, 0
    %171 = vmatpush.msra.mxu0 0.0
    %172 = vmatpush.msra.mxu0 0.0
    %173 = vmatpush.msra.mxu0 0.0
    %174 = vmatpush.msra.mxu0 0.0
    %175 = vmatpush.msra.mxu0 0.0
    %176 = vmatpush.msra.mxu0 0.0
    %177 = vmatpush.msra.mxu0 0.0
    %178 = vmatpush.msra.mxu0 0.0
    %179 = vmatpush.msra.mxu0 0.0
    %180 = vmatpush.msra.mxu0 0.0
    %181 = vmatpush.msra.mxu0 0.0
    %182 = vmatpush.msra.mxu0 0.0
    %183 = vmatpush.msra.mxu0 %v158
    %184 = vmatpush.msra.mxu0 %v157
    %185 = vmatpush.msra.mxu0 %v156
    %186 = vmatpush.msra.mxu0 %v155
    %187 = vmatmul.f32.gmra.mxu0 %v169
    %v188 = vpop.f32.mrf.mxu0
    %v189 = vadd.f32 %v161, %v188
    %190 = vdwg.mxu0
    %v192 = vrot.slane %v189, 1
    %v193 = vld [vmem:[#allocation8] sm:$0xff]
    %v194 = vld [vmem:[#allocation8 + $0x8] sm:$0xff]
    %v195 = vld [vmem:[#allocation8 + $0x10] sm:$0xff]
    %v196 = vld [vmem:[#allocation8 + $0x18] sm:$0xff]
    %v197 = vld [vmem:[%s5] sm:$0x1]
    %v199 = vperm.slane %v197, 0
    %v201 = vsel %vm168, %v151, 0
    %v203 = vsel %vm168, %v152, 0
    %205 = vmatpush.msra.mxu0 0.0
    %206 = vmatpush.msra.mxu0 0.0
    %207 = vmatpush.msra.mxu0 0.0
    %208 = vmatpush.msra.mxu0 0.0
    %209 = vmatpush.msra.mxu0 0.0
    %210 = vmatpush.msra.mxu0 0.0
    %211 = vmatpush.msra.mxu0 0.0
    %212 = vmatpush.msra.mxu0 0.0
    %213 = vmatpush.msra.mxu0 0.0
    %214 = vmatpush.msra.mxu0 0.0
    %215 = vmatpush.msra.mxu0 0.0
    %216 = vmatpush.msra.mxu0 0.0
    %217 = vmatpush.msra.mxu0 %v196
    %218 = vmatpush.msra.mxu0 %v195
    %219 = vmatpush.msra.mxu0 %v194
    %220 = vmatpush.msra.mxu0 %v193
    %221 = vmatmul.f32.gmra.mxu0 %v201
    %v222 = vpop.f32.mrf.mxu0
    %v223 = vadd.f32 %v199, %v222
    %224 = vmatmul.f32.gmra.mxu0 %v203
    %v225 = vpop.f32.mrf.mxu0
    %v226 = vadd.f32 %v199, %v225
    %227 = vdwg.mxu0
    %v228 = vsel %vm168, %v189, 0
    %v231 = vsel %vm168, %v223, 0
    %233 = vmatpush.xpose.msra.mxu0 0.0
    %234 = vmatpush.xpose.msra.mxu0 0.0
    %235 = vmatpush.xpose.msra.mxu0 0.0
    %236 = vmatpush.xpose.msra.mxu0 0.0
    %237 = vmatpush.xpose.msra.mxu0 0.0
    %238 = vmatpush.xpose.msra.mxu0 0.0
    %239 = vmatpush.xpose.msra.mxu0 0.0
    %240 = vmatpush.xpose.msra.mxu0 0.0
    %241 = vmatpush.xpose.msra.mxu0 0.0
    %242 = vmatpush.xpose.msra.mxu0 0.0
    %243 = vmatpush.xpose.msra.mxu0 0.0
    %244 = vmatpush.xpose.msra.mxu0 0.0
    %245 = vmatpush.xpose.msra.mxu0 0.0
    %246 = vmatpush.xpose.msra.mxu0 0.0
    %247 = vmatpush.xpose.msra.mxu0 0.0
    %248 = vmatpush.xpose.msra.mxu0 %v231
    %249 = vmatmul.f32.gmra.mxu0 %v228
    %v250 = vpop.f32.mrf.mxu0
    %v251 = vadd.f32 0.0, %v250
    %252 = vdwg.mxu0
    %v253 = vsel %vm168, %v192, 0
    %v256 = vsel %vm168, %v226, 0
    %258 = vmatpush.xpose.msra.mxu0 0.0
    %259 = vmatpush.xpose.msra.mxu0 0.0
    %260 = vmatpush.xpose.msra.mxu0 0.0
    %261 = vmatpush.xpose.msra.mxu0 0.0
    %262 = vmatpush.xpose.msra.mxu0 0.0
    %263 = vmatpush.xpose.msra.mxu0 0.0
    %264 = vmatpush.xpose.msra.mxu0 0.0
    %265 = vmatpush.xpose.msra.mxu0 0.0
    %266 = vmatpush.xpose.msra.mxu0 0.0
    %267 = vmatpush.xpose.msra.mxu0 0.0
    %268 = vmatpush.xpose.msra.mxu0 0.0
    %269 = vmatpush.xpose.msra.mxu0 0.0
    %270 = vmatpush.xpose.msra.mxu0 0.0
    %271 = vmatpush.xpose.msra.mxu0 0.0
    %272 = vmatpush.xpose.msra.mxu0 0.0
    %273 = vmatpush.xpose.msra.mxu0 %v256
    %274 = vmatmul.f32.gmra.mxu0 %v253
    %v275 = vpop.f32.mrf.mxu0
    %v276 = vadd.f32 0.0, %v275
    %277 = vdwg.mxu0
    %vm278 = vcmask 57344
    %v279 = vsel %vm278, %v251, -inf
    %280 = vmax.xlane.f32.xlu0 %v279
    %v281 = vpop.xlane.xlu0 %280
    %v282 = vsel %vm278, %v276, -inf
    %283 = vmax.xlane.f32.xlu0 %v282
    %v284 = vpop.xlane.xlu0 %283
    %v285 = vsub.f32 %v251, %v281
    %v286 = vsub.f32 %v276, %v284
    %v287 = vmul.f32 %v285, 1.442695
    %v288 = vpow.pop %v287
    %v289 = vmul.f32 %v286, 1.442695
    %v290 = vpow.pop %v289
    %v291 = vsel %vm278, %v288, 0.0
    %292 = vadd.xlane.f32.xlu0 %v291
    %v293 = vpop.xlane.xlu0 %292
    %v294 = vsel %vm278, %v290, 0.0
    %295 = vadd.xlane.f32.xlu0 %v294
    %v296 = vpop.xlane.xlu0 %295
    %v297 = vrcp.pop %v293
    %v298 = vrcp.pop %v296
    %v299 = vmul.f32 %v288, %v297
    %v300 = vmul.f32 %v290, %v298
    %301 = vrot.lane.b32.xlu0 %v223, 96
    %v302 = vpop.permute.xlu0 %301
    %vm304 = vcmask 64512
    %v306 = vsel %vm304, %v299, 0
    %308 = vmatpush.msra.mxu0 0.0
    %309 = vmatpush.msra.mxu0 0.0
    %310 = vmatpush.msra.mxu0 0.0
    %311 = vmatpush.msra.mxu0 0.0
    %312 = vmatpush.msra.mxu0 0.0
    %313 = vmatpush.msra.mxu0 0.0
    %314 = vmatpush.msra.mxu0 0.0
    %315 = vmatpush.msra.mxu0 0.0
    %316 = vmatpush.msra.mxu0 0.0
    %317 = vmatpush.msra.mxu0 0.0
    %318 = vmatpush.msra.mxu0 0.0
    %319 = vmatpush.msra.mxu0 0.0
    %320 = vmatpush.msra.mxu0 0.0
    %321 = vmatpush.msra.mxu0 0.0
    %322 = vmatpush.msra.mxu0 0.0
    %323 = vmatpush.msra.mxu0 %v302
    %324 = vmatmul.f32.gmra.mxu0 %v306
    %v325 = vpop.f32.mrf.mxu0
    %v326 = vadd.f32 0.0, %v325
    %327 = vdwg.mxu0
    %328 = vrot.lane.b32.xlu0 %v226, 96
    %v329 = vpop.permute.xlu0 %328
    %v332 = vsel %vm304, %v300, 0
    %334 = vmatpush.msra.mxu0 0.0
    %335 = vmatpush.msra.mxu0 0.0
    %336 = vmatpush.msra.mxu0 0.0
    %337 = vmatpush.msra.mxu0 0.0
    %338 = vmatpush.msra.mxu0 0.0
    %339 = vmatpush.msra.mxu0 0.0
    %340 = vmatpush.msra.mxu0 0.0
    %341 = vmatpush.msra.mxu0 0.0
    %342 = vmatpush.msra.mxu0 0.0
    %343 = vmatpush.msra.mxu0 0.0
    %344 = vmatpush.msra.mxu0 0.0
    %345 = vmatpush.msra.mxu0 0.0
    %346 = vmatpush.msra.mxu0 0.0
    %347 = vmatpush.msra.mxu0 0.0
    %348 = vmatpush.msra.mxu0 0.0
    %349 = vmatpush.msra.mxu0 %v329
    %350 = vmatmul.f32.gmra.mxu0 %v332
    %v351 = vpop.f32.mrf.mxu0
    %v352 = vadd.f32 0.0, %v351
    %353 = vdwg.mxu0
    %v354 = vld [vmem:[#allocation10] sm:$0xff]
    %v355 = vld [vmem:[#allocation10 + $0x8] sm:$0xff]
    %v356 = vld [vmem:[#allocation10 + $0x10] sm:$0xff]
    %v357 = vld [vmem:[#allocation10 + $0x18] sm:$0xff]
    %v358 = vld [vmem:[%s7] sm:$0x1]
    %v360 = vperm.slane %v358, 0
    %v364 = vrot.slane %v352, 7
    %v365 = vsel %vm166, %v364, %v326
    %v366 = vsel %vm168, %v365, 0
    %368 = vmatpush.msra.mxu0 0.0
    %369 = vmatpush.msra.mxu0 0.0
    %370 = vmatpush.msra.mxu0 0.0
    %371 = vmatpush.msra.mxu0 0.0
    %372 = vmatpush.msra.mxu0 0.0
    %373 = vmatpush.msra.mxu0 0.0
    %374 = vmatpush.msra.mxu0 0.0
    %375 = vmatpush.msra.mxu0 0.0
    %376 = vmatpush.msra.mxu0 0.0
    %377 = vmatpush.msra.mxu0 0.0
    %378 = vmatpush.msra.mxu0 0.0
    %379 = vmatpush.msra.mxu0 0.0
    %380 = vmatpush.msra.mxu0 %v357
    %381 = vmatpush.msra.mxu0 %v356
    %382 = vmatpush.msra.mxu0 %v355
    %383 = vmatpush.msra.mxu0 %v354
    %384 = vmatmul.f32.gmra.mxu0 %v366
    %v385 = vpop.f32.mrf.mxu0
    %v386 = vadd.f32 %v360, %v385
    %387 = vdwg.mxu0
    %v389 = vrot.slane %v386, 1
    %v390 = vld [vmem:[#allocation11] sm:$0xff]
    %v391 = vld [vmem:[#allocation11 + $0x8] sm:$0xff]
    %v392 = vld [vmem:[#allocation11 + $0x10] sm:$0xff]
    %v393 = vld [vmem:[#allocation11 + $0x18] sm:$0xff]
    %v394 = vld [vmem:[%s9] sm:$0x1]
    %v396 = vperm.slane %v394, 0
    %v399 = vsel %vm168, %v153, 0
    %v402 = vsel %vm168, %v154, 0
    %404 = vmatpush.msra.mxu0 0.0
    %405 = vmatpush.msra.mxu0 0.0
    %406 = vmatpush.msra.mxu0 0.0
    %407 = vmatpush.msra.mxu0 0.0
    %408 = vmatpush.msra.mxu0 0.0
    %409 = vmatpush.msra.mxu0 0.0
    %410 = vmatpush.msra.mxu0 0.0
    %411 = vmatpush.msra.mxu0 0.0
    %412 = vmatpush.msra.mxu0 0.0
    %413 = vmatpush.msra.mxu0 0.0
    %414 = vmatpush.msra.mxu0 0.0
    %415 = vmatpush.msra.mxu0 0.0
    %416 = vmatpush.msra.mxu0 %v393
    %417 = vmatpush.msra.mxu0 %v392
    %418 = vmatpush.msra.mxu0 %v391
    %419 = vmatpush.msra.mxu0 %v390
    %420 = vmatmul.f32.gmra.mxu0 %v399
    %v421 = vpop.f32.mrf.mxu0
    %v422 = vadd.f32 %v396, %v421
    %423 = vmatmul.f32.gmra.mxu0 %v402
    %v424 = vpop.f32.mrf.mxu0
    %v425 = vadd.f32 %v396, %v424
    %426 = vdwg.mxu0
    %v427 = vsel %vm168, %v386, 0
    %v430 = vsel %vm168, %v422, 0
    %432 = vmatpush.xpose.msra.mxu0 0.0
    %433 = vmatpush.xpose.msra.mxu0 0.0
    %434 = vmatpush.xpose.msra.mxu0 0.0
    %435 = vmatpush.xpose.msra.mxu0 0.0
    %436 = vmatpush.xpose.msra.mxu0 0.0
    %437 = vmatpush.xpose.msra.mxu0 0.0
    %438 = vmatpush.xpose.msra.mxu0 0.0
    %439 = vmatpush.xpose.msra.mxu0 0.0
    %440 = vmatpush.xpose.msra.mxu0 0.0
    %441 = vmatpush.xpose.msra.mxu0 0.0
    %442 = vmatpush.xpose.msra.mxu0 0.0
    %443 = vmatpush.xpose.msra.mxu0 0.0
    %444 = vmatpush.xpose.msra.mxu0 0.0
    %445 = vmatpush.xpose.msra.mxu0 0.0
    %446 = vmatpush.xpose.msra.mxu0 0.0
    %447 = vmatpush.xpose.msra.mxu0 %v430
    %448 = vmatmul.f32.gmra.mxu0 %v427
    %v449 = vpop.f32.mrf.mxu0
    %v450 = vadd.f32 0.0, %v449
    %451 = vdwg.mxu0
    %v452 = vsel %vm168, %v389, 0
    %v455 = vsel %vm168, %v425, 0
    %457 = vmatpush.xpose.msra.mxu0 0.0
    %458 = vmatpush.xpose.msra.mxu0 0.0
    %459 = vmatpush.xpose.msra.mxu0 0.0
    %460 = vmatpush.xpose.msra.mxu0 0.0
    %461 = vmatpush.xpose.msra.mxu0 0.0
    %462 = vmatpush.xpose.msra.mxu0 0.0
    %463 = vmatpush.xpose.msra.mxu0 0.0
    %464 = vmatpush.xpose.msra.mxu0 0.0
    %465 = vmatpush.xpose.msra.mxu0 0.0
    %466 = vmatpush.xpose.msra.mxu0 0.0
    %467 = vmatpush.xpose.msra.mxu0 0.0
    %468 = vmatpush.xpose.msra.mxu0 0.0
    %469 = vmatpush.xpose.msra.mxu0 0.0
    %470 = vmatpush.xpose.msra.mxu0 0.0
    %471 = vmatpush.xpose.msra.mxu0 0.0
    %472 = vmatpush.xpose.msra.mxu0 %v455
    %473 = vmatmul.f32.gmra.mxu0 %v452
    %v474 = vpop.f32.mrf.mxu0
    %v475 = vadd.f32 0.0, %v474
    %476 = vdwg.mxu0
    %v477 = vsel %vm278, %v450, -inf
    %478 = vmax.xlane.f32.xlu0 %v477
    %v479 = vpop.xlane.xlu0 %478
    %v480 = vsel %vm278, %v475, -inf
    %481 = vmax.xlane.f32.xlu0 %v480
    %v482 = vpop.xlane.xlu0 %481
    %v483 = vsub.f32 %v450, %v479
    %v484 = vsub.f32 %v475, %v482
    %v485 = vmul.f32 %v483, 1.442695
    %v486 = vpow.pop %v485
    %v487 = vmul.f32 %v484, 1.442695
    %v488 = vpow.pop %v487
    %v489 = vsel %vm278, %v486, 0.0
    %490 = vadd.xlane.f32.xlu0 %v489
    %v491 = vpop.xlane.xlu0 %490
    %v492 = vsel %vm278, %v488, 0.0
    %493 = vadd.xlane.f32.xlu0 %v492
    %v494 = vpop.xlane.xlu0 %493
    %v495 = vrcp.pop %v491
    %v496 = vrcp.pop %v494
    %v497 = vmul.f32 %v486, %v495
    %v498 = vmul.f32 %v488, %v496
    %499 = vrot.lane.b32.xlu0 %v422, 96
    %v500 = vpop.permute.xlu0 %499
    %v503 = vsel %vm304, %v497, 0
    %505 = vmatpush.msra.mxu0 0.0
    %506 = vmatpush.msra.mxu0 0.0
    %507 = vmatpush.msra.mxu0 0.0
    %508 = vmatpush.msra.mxu0 0.0
    %509 = vmatpush.msra.mxu0 0.0
    %510 = vmatpush.msra.mxu0 0.0
    %511 = vmatpush.msra.mxu0 0.0
    %512 = vmatpush.msra.mxu0 0.0
    %513 = vmatpush.msra.mxu0 0.0
    %514 = vmatpush.msra.mxu0 0.0
    %515 = vmatpush.msra.mxu0 0.0
    %516 = vmatpush.msra.mxu0 0.0
    %517 = vmatpush.msra.mxu0 0.0
    %518 = vmatpush.msra.mxu0 0.0
    %519 = vmatpush.msra.mxu0 0.0
    %520 = vmatpush.msra.mxu0 %v500
    %521 = vmatmul.f32.gmra.mxu0 %v503
    %v522 = vpop.f32.mrf.mxu0
    %v523 = vadd.f32 0.0, %v522
    %524 = vdwg.mxu0
    %525 = vrot.lane.b32.xlu0 %v425, 96
    %v526 = vpop.permute.xlu0 %525
    %v529 = vsel %vm304, %v498, 0
    %531 = vmatpush.msra.mxu0 0.0
    %532 = vmatpush.msra.mxu0 0.0
    %533 = vmatpush.msra.mxu0 0.0
    %534 = vmatpush.msra.mxu0 0.0
    %535 = vmatpush.msra.mxu0 0.0
    %536 = vmatpush.msra.mxu0 0.0
    %537 = vmatpush.msra.mxu0 0.0
    %538 = vmatpush.msra.mxu0 0.0
    %539 = vmatpush.msra.mxu0 0.0
    %540 = vmatpush.msra.mxu0 0.0
    %541 = vmatpush.msra.mxu0 0.0
    %542 = vmatpush.msra.mxu0 0.0
    %543 = vmatpush.msra.mxu0 0.0
    %544 = vmatpush.msra.mxu0 0.0
    %545 = vmatpush.msra.mxu0 0.0
    %546 = vmatpush.msra.mxu0 %v526
    %547 = vmatmul.f32.gmra.mxu0 %v529
    %v548 = vpop.f32.mrf.mxu0
    %v549 = vadd.f32 0.0, %v548
    %550 = vdwg.mxu0
    %v551 = vld [vmem:[#allocation13] sm:$0xff]
    %v552 = vld [vmem:[#allocation13 + $0x8] sm:$0xff]
    %v553 = vld [vmem:[#allocation13 + $0x10] sm:$0xff]
    %v554 = vld [vmem:[#allocation13 + $0x18] sm:$0xff]
    %v555 = vld [vmem:[#allocation13 + $0x20] sm:$0xff]
    %v556 = vld [vmem:[#allocation13 + $0x28] sm:$0xff]
    %v557 = vld [vmem:[#allocation13 + $0x30] sm:$0xff]
    %v558 = vld [vmem:[#allocation13 + $0x38] sm:$0xff]
    %559 = vmatpush.msra.mxu0 0.0
    %560 = vmatpush.msra.mxu0 0.0
    %561 = vmatpush.msra.mxu0 0.0
    %562 = vmatpush.msra.mxu0 0.0
    %563 = vmatpush.msra.mxu0 0.0
    %564 = vmatpush.msra.mxu0 0.0
    %565 = vmatpush.msra.mxu0 0.0
    %566 = vmatpush.msra.mxu0 0.0
    %567 = vmatpush.msra.mxu0 0.0
    %568 = vmatpush.msra.mxu0 0.0
    %569 = vmatpush.msra.mxu0 0.0
    %570 = vmatpush.msra.mxu0 0.0
    %571 = vmatpush.msra.mxu0 %v558
    %572 = vmatpush.msra.mxu0 %v557
    %573 = vmatpush.msra.mxu0 %v556
    %574 = vmatpush.msra.mxu0 %v555
    %575 = vmatmul.f32.gmra.mxu0 %v366
    %v576 = vpop.f32.mrf.mxu0
    %v577 = vadd.f32 0.0, %v576
    %578 = vdwg.mxu0
    %v581 = vrot.slane %v549, 7
    %v582 = vsel %vm166, %v581, %v523
    %v583 = vsel %vm168, %v582, 0
    %585 = vmatpush.msra.mxu0 0.0
    %586 = vmatpush.msra.mxu0 0.0
    %587 = vmatpush.msra.mxu0 0.0
    %588 = vmatpush.msra.mxu0 0.0
    %589 = vmatpush.msra.mxu0 0.0
    %590 = vmatpush.msra.mxu0 0.0
    %591 = vmatpush.msra.mxu0 0.0
    %592 = vmatpush.msra.mxu0 0.0
    %593 = vmatpush.msra.mxu0 0.0
    %594 = vmatpush.msra.mxu0 0.0
    %595 = vmatpush.msra.mxu0 0.0
    %596 = vmatpush.msra.mxu0 0.0
    %597 = vmatpush.msra.mxu0 %v554
    %598 = vmatpush.msra.mxu0 %v553
    %599 = vmatpush.msra.mxu0 %v552
    %600 = vmatpush.msra.mxu0 %v551
    %601 = vmatmul.f32.gmra.mxu0 %v583
    %v602 = vpop.f32.mrf.mxu0
    %v603 = vadd.f32 %v577, %v602
    %604 = vdwg.mxu0
    %v605 = vld [vmem:[%s11] sm:$0x1]
    %v607 = vperm.slane %v605, 0
    %v609 = vadd.f32 %v603, %v607
    %610 = vst [vmem:[#allocation14] sm:$0x3] %v609
    // Predicated region
    $region78: #{tpu_custom_call.1} parent=1 // pred_check
      _
    $region79: #{tpu_custom_call.1} parent=1 // pred_check_branch
      %612 = sbr.rel (0) target = $region81
    $region80: #{tpu_custom_call.1} parent=1 // pred_region
      %614 = vsyncadd [#allocation4], 0
      %s616 = sshll.u32 [#allocation14], 4
      %s617 = int_to_ptr.vmem [resolvable:$true] %s616
      %s618 = sshll.u32 %s12, 4
      %s619 = int_to_ptr.hbm [resolvable:$true] %s618
      %621 = dma.vmem_to_hbm [thread:$0]  %s617, 32, %s619, [#allocation4]
    $region81: #{tpu_custom_call.1} parent=1 // pred_fallthru
      _
    // Predicated region
    $region82: #{tpu_custom_call.1} parent=1 // pred_check
      _
    $region83: #{tpu_custom_call.1} parent=1 // pred_check_branch
      %623 = sbr.rel (0) target = $region85
    $region84: #{tpu_custom_call.1} parent=1 // pred_region
      %625 = dma.done [#allocation4], 32
    $region85: #{tpu_custom_call.1} parent=1 // pred_fallthru
      _
    %626 = vsyncpa [#allocation3], 1
    %627 = vsyncpa [#allocation6], 1
    %628 = vsyncpa [#allocation9], 1
    %629 = vsyncpa [#allocation12], 1
    %630 = vsyncpa [#allocation4], 1

</llo_original>
